<compile_context>
chip_gen: v6e
topology: v6e:2x2x1
jax: 0.10.0
libtpu: 0.0.40
codegen_flags: <defaults>
</compile_context>

<pallas_src>
import functools

import jax
import jax.numpy as jnp
from jax.experimental import pallas as pl
from jax.experimental.pallas import tpu as pltpu

LANE = 128
SMOOTH = 1e-05


def _dice_bce_kernel(x_ref, t_ref, out_ref,
                     bce_acc, inter_acc, p2_acc, t2_acc,
                     *, n_valid, weight):
    i = pl.program_id(0)
    nblk = pl.num_programs(0)

    @pl.when(i == 0)
    def _():
        bce_acc[...] = jnp.zeros_like(bce_acc)
        inter_acc[...] = jnp.zeros_like(inter_acc)
        p2_acc[...] = jnp.zeros_like(p2_acc)
        t2_acc[...] = jnp.zeros_like(t2_acc)

    def _partials():
        x = x_ref[...].astype(jnp.float32)
        t = t_ref[...].astype(jnp.float32)
        # Stable BCE-with-logits: max(x,0) - x*t + log1p(exp(-|x|)).
        # Reuse e = exp(-|x|) for sigmoid(x) to keep transcendentals at
        # one exp + one log1p + one divide per element (EUP-friendly; no pow).
        e = jnp.exp(-jnp.abs(x))
        bce = jnp.maximum(x, 0.0) - x * t + jnp.log1p(e)
        inv = 1.0 / (1.0 + e)                    # sigmoid(|x|)
        p = jnp.where(x >= 0.0, inv, e * inv)    # sigmoid(x)
        t_bin = (t > 0.5).astype(jnp.float32)
        return bce, p * t_bin, p * p, t_bin

    def _accum(bce, inter, p2, t2):
        # Lane-preserving partial sums -> cheap vector adds in the hot path;
        # the single cross-lane reduce happens once, in the epilogue.
        bce_acc[...] += jnp.sum(bce, axis=0, keepdims=True)
        inter_acc[...] += jnp.sum(inter, axis=0, keepdims=True)
        p2_acc[...] += jnp.sum(p2, axis=0, keepdims=True)
        t2_acc[...] += jnp.sum(t2, axis=0, keepdims=True)

    # Hot path: every block except the last has no padding -> no mask work.
    @pl.when(i < nblk - 1)
    def _():
        _accum(*_partials())

    # Last block: mask the padded / out-of-bounds tail, then finalize.
    @pl.when(i == nblk - 1)
    def _():
        bce, inter, p2, t2 = _partials()
        rows, cols = bce.shape
        base = i * (rows * cols)
        flat = (base
                + jax.lax.broadcasted_iota(jnp.int32, (rows, cols), 0) * cols
                + jax.lax.broadcasted_iota(jnp.int32, (rows, cols), 1))
        valid = flat < n_valid
        _accum(jnp.where(valid, bce, 0.0),
               jnp.where(valid, inter, 0.0),
               jnp.where(valid, p2, 0.0),
               jnp.where(valid, t2, 0.0))

        n_f = jnp.float32(n_valid)
        bce_mean = jnp.sum(bce_acc[...], keepdims=True) / n_f
        dice = ((2.0 * weight * jnp.sum(inter_acc[...], keepdims=True) + SMOOTH)
                / (jnp.sum(p2_acc[...], keepdims=True)
                   + jnp.sum(t2_acc[...], keepdims=True) + SMOOTH))
        out_ref[...] = bce_mean - dice


def dice_bce_loss(inputs, targets, *, weight=1.0, block_rows=1024):
    """Pallas implementation of Dice_BCELoss.forward (mean-reduced scalar)."""
    n = int(inputs.size)
    assert int(targets.size) == n

    # Flatten in native dtype (no f32 up-cast in HBM).
    x_flat = inputs.reshape(-1)
    t_flat = targets.reshape(-1)

    rem = n % LANE
    if rem:
        # TODO(synk): tail pad copies the flat array once; only taken when
        # numel is not a multiple of 128 (pads < 128 elements, masked in-kernel).
        pad = LANE - rem
        x_flat = jnp.pad(x_flat, (0, pad))
        t_flat = jnp.pad(t_flat, (0, pad))

    rows = x_flat.shape[0] // LANE
    x2 = x_flat.reshape(rows, LANE)
    t2 = t_flat.reshape(rows, LANE)

    if rows <= block_rows:
        block_rows = rows          # single block == full array dims
        n_blocks = 1
    else:
        n_blocks = pl.cdiv(rows, block_rows)   # ragged last block handled in-kernel

    kernel = functools.partial(_dice_bce_kernel,
                               n_valid=n, weight=float(weight))

    out = pl.pallas_call(
        kernel,
        out_shape=jax.ShapeDtypeStruct((1, 1), jnp.float32),
        grid_spec=pltpu.PrefetchScalarGridSpec(
            num_scalar_prefetch=0,
            grid=(n_blocks,),
            in_specs=[
                pl.BlockSpec((block_rows, LANE), lambda i: (i, 0)),
                pl.BlockSpec((block_rows, LANE), lambda i: (i, 0)),
            ],
            out_specs=pl.BlockSpec((1, 1), lambda i: (0, 0)),
            scratch_shapes=[pltpu.VMEM((1, LANE), jnp.float32)] * 4,
        ),
        compiler_params=pltpu.CompilerParams(
            dimension_semantics=("arbitrary",)),
    )(x2, t2)
    return out[0, 0]


def _reference_dice_bce(inputs, targets, weight=1.0):
    x = inputs.astype(jnp.float32)
    t = targets.astype(jnp.float32)
    p = jax.nn.sigmoid(x)
    t_bin = (t > 0.5).astype(jnp.float32)
    dice = ((2.0 * weight * jnp.sum(p * t_bin) + SMOOTH)
            / (jnp.sum(p * p) + jnp.sum(t_bin * t_bin) + SMOOTH))
    bce = jnp.mean(jnp.maximum(x, 0.0) - x * t + jnp.log1p(jnp.exp(-jnp.abs(x))))
    return bce - dice


if __name__ == "__main__":
    key = jax.random.PRNGKey(0)
    k1, k2, k3, k4 = jax.random.split(key, 4)

    # NCHW-shaped logits and binary targets (small shapes).
    x = jax.random.normal(k1, (2, 4, 16, 16), dtype=jnp.float32)
    t = jax.random.bernoulli(k2, 0.5, (2, 4, 16, 16)).astype(jnp.float32)

    # Default (single large block) path.
    loss = jax.block_until_ready(dice_bce_loss(x, t))
    ref = _reference_dice_bce(x, t)
    assert jnp.allclose(loss, ref, rtol=1e-5, atol=1e-5), (loss, ref)

    # Multi-block accumulation path (same data, small tiles).
    loss2 = jax.block_until_ready(dice_bce_loss(x, t, block_rows=8))
    assert jnp.allclose(loss2, ref, rtol=1e-5, atol=1e-5), (loss2, ref)

    # Tail-mask path (numel not a multiple of 128) + non-default weight.
    x3 = jax.random.normal(k3, (2, 1000), dtype=jnp.float32)
    t3 = jax.random.bernoulli(k4, 0.3, (2, 1000)).astype(jnp.float32)
    loss3 = jax.block_until_ready(dice_bce_loss(x3, t3, weight=2.0, block_rows=8))
    ref3 = _reference_dice_bce(x3, t3, weight=2.0)
    assert jnp.allclose(loss3, ref3, rtol=1e-5, atol=1e-5), (loss3, ref3)

    # Native bf16 logits: no wrapper up-cast, kernel casts per-tile in VMEM.
    xb = x.astype(jnp.bfloat16)
    lossb = jax.block_until_ready(dice_bce_loss(xb, t))
    refb = _reference_dice_bce(xb, t)
    assert jnp.allclose(lossb, refb, rtol=1e-5, atol=1e-5), (lossb, refb)

    print("KERNEL_OK")
</pallas_src>

<mosaic_0001>
module attributes {stable_mosaic.version = 11 : i64} {
  func.func @_dice_bce_kernel(%arg0: i32, %arg1: memref<16x128xf32, #tpu.memory_space<vmem>>, %arg2: memref<16x128xf32, #tpu.memory_space<vmem>>, %arg3: memref<1x1xf32, #tpu.memory_space<vmem>>, %arg4: memref<1x128xf32, #tpu.memory_space<vmem>>, %arg5: memref<1x128xf32, #tpu.memory_space<vmem>>, %arg6: memref<1x128xf32, #tpu.memory_space<vmem>>, %arg7: memref<1x128xf32, #tpu.memory_space<vmem>>) attributes {dimension_semantics = [#tpu.dimension_semantics<arbitrary>], iteration_bounds = array<i64: 1>, scalar_prefetch = 0 : i64, scratch_operands = 4 : i64, tpu.core_type = #tpu.core_type<tc>, window_params = [{transform_indices = @transform_0, window_bounds = array<i64: 16, 128>}, {transform_indices = @transform_1, window_bounds = array<i64: 16, 128>}, {pipeline_mode = #tpu.pipeline_mode<synchronous>, transform_indices = @transform_2, window_bounds = array<i64: 1, 1>}]} {
    %c0_i32 = arith.constant 0 : i32
    %0 = arith.cmpi eq, %arg0, %c0_i32 : i32
    %1 = arith.extui %0 : i1 to i32
    %c0_i32_0 = arith.constant 0 : i32
    %2 = arith.cmpi ne, %1, %c0_i32_0 : i32
    scf.if %2 {
      %cst = arith.constant 0.000000e+00 : f32
      %9 = vector.broadcast %cst : f32 to vector<1x128xf32>
      %c0 = arith.constant 0 : index
      %c0_5 = arith.constant 0 : index
      %10 = vector.load %arg4[%c0, %c0_5] : memref<1x128xf32, #tpu.memory_space<vmem>>, vector<1x128xf32>
      tpu.vector_store %arg4[%c0, %c0_5], %9 {strides = array<i32>} : memref<1x128xf32, #tpu.memory_space<vmem>>, vector<1x128xf32>,
      %cst_6 = arith.constant 0.000000e+00 : f32
      %11 = vector.broadcast %cst_6 : f32 to vector<1x128xf32>
      %c0_7 = arith.constant 0 : index
      %c0_8 = arith.constant 0 : index
      %12 = vector.load %arg5[%c0_7, %c0_8] : memref<1x128xf32, #tpu.memory_space<vmem>>, vector<1x128xf32>
      tpu.vector_store %arg5[%c0_7, %c0_8], %11 {strides = array<i32>} : memref<1x128xf32, #tpu.memory_space<vmem>>, vector<1x128xf32>,
      %cst_9 = arith.constant 0.000000e+00 : f32
      %13 = vector.broadcast %cst_9 : f32 to vector<1x128xf32>
      %c0_10 = arith.constant 0 : index
      %c0_11 = arith.constant 0 : index
      %14 = vector.load %arg6[%c0_10, %c0_11] : memref<1x128xf32, #tpu.memory_space<vmem>>, vector<1x128xf32>
      tpu.vector_store %arg6[%c0_10, %c0_11], %13 {strides = array<i32>} : memref<1x128xf32, #tpu.memory_space<vmem>>, vector<1x128xf32>,
      %cst_12 = arith.constant 0.000000e+00 : f32
      %15 = vector.broadcast %cst_12 : f32 to vector<1x128xf32>
      %c0_13 = arith.constant 0 : index
      %c0_14 = arith.constant 0 : index
      %16 = vector.load %arg7[%c0_13, %c0_14] : memref<1x128xf32, #tpu.memory_space<vmem>>, vector<1x128xf32>
      tpu.vector_store %arg7[%c0_13, %c0_14], %15 {strides = array<i32>} : memref<1x128xf32, #tpu.memory_space<vmem>>, vector<1x128xf32>,
    } else {
    }
    %c0_i32_1 = arith.constant 0 : i32
    %3 = arith.cmpi slt, %arg0, %c0_i32_1 : i32
    %4 = arith.extui %3 : i1 to i32
    %c0_i32_2 = arith.constant 0 : i32
    %5 = arith.cmpi ne, %4, %c0_i32_2 : i32
    scf.if %5 {
      %c0 = arith.constant 0 : index
      %c0_5 = arith.constant 0 : index
      %9 = vector.load %arg1[%c0, %c0_5] : memref<16x128xf32, #tpu.memory_space<vmem>>, vector<16x128xf32>
      %c0_6 = arith.constant 0 : index
      %c0_7 = arith.constant 0 : index
      %10 = vector.load %arg2[%c0_6, %c0_7] : memref<16x128xf32, #tpu.memory_space<vmem>>, vector<16x128xf32>
      %11 = math.absf %9 : vector<16x128xf32>
      %cst = arith.constant 0.000000e+00 : f32
      %12 = vector.broadcast %cst : f32 to vector<16x128xf32>
      %13 = arith.subf %12, %11 : vector<16x128xf32>
      %14 = math.exp %13 : vector<16x128xf32>
      %cst_8 = arith.constant 0.000000e+00 : f32
      %15 = vector.broadcast %cst_8 : f32 to vector<16x128xf32>
      %16 = arith.maximumf %9, %15 : vector<16x128xf32>
      %17 = arith.mulf %9, %10 : vector<16x128xf32>
      %18 = arith.subf %16, %17 : vector<16x128xf32>
      %19 = math.log1p %14 : vector<16x128xf32>
      %20 = arith.addf %18, %19 : vector<16x128xf32>
      %cst_9 = arith.constant 1.000000e+00 : f32
      %21 = vector.broadcast %cst_9 : f32 to vector<16x128xf32>
      %22 = arith.addf %21, %14 : vector<16x128xf32>
      %cst_10 = arith.constant 1.000000e+00 : f32
      %23 = vector.broadcast %cst_10 : f32 to vector<16x128xf32>
      %24 = arith.divf %23, %22 : vector<16x128xf32>
      %cst_11 = arith.constant 0.000000e+00 : f32
      %25 = vector.broadcast %cst_11 : f32 to vector<16x128xf32>
      %26 = arith.cmpf oge, %9, %25 : vector<16x128xf32>
      %27 = arith.mulf %14, %24 : vector<16x128xf32>
      %28 = arith.select %26, %24, %27 : vector<16x128xi1>, vector<16x128xf32>
      %cst_12 = arith.constant 5.000000e-01 : f32
      %29 = vector.broadcast %cst_12 : f32 to vector<16x128xf32>
      %30 = arith.cmpf ogt, %10, %29 : vector<16x128xf32>
      %31 = arith.extui %30 : vector<16x128xi1> to vector<16x128xi32>
      %32 = arith.sitofp %31 : vector<16x128xi32> to vector<16x128xf32>
      %33 = arith.mulf %28, %32 : vector<16x128xf32>
      %34 = arith.mulf %28, %28 : vector<16x128xf32>
      %c0_13 = arith.constant 0 : index
      %c0_14 = arith.constant 0 : index
      %35 = vector.load %arg4[%c0_13, %c0_14] : memref<1x128xf32, #tpu.memory_space<vmem>>, vector<1x128xf32>
      %cst_15 = arith.constant dense<0.000000e+00> : vector<128xf32>
      %36 = vector.multi_reduction <add>, %20, %cst_15 [0] : vector<16x128xf32> to vector<128xf32>
      %37 = vector.shape_cast %36 : vector<128xf32> to vector<1x128xf32>
      %38 = arith.addf %35, %37 : vector<1x128xf32>
      %c0_16 = arith.constant 0 : index
      %c0_17 = arith.constant 0 : index
      %39 = vector.load %arg4[%c0_16, %c0_17] : memref<1x128xf32, #tpu.memory_space<vmem>>, vector<1x128xf32>
      tpu.vector_store %arg4[%c0_16, %c0_17], %38 {strides = array<i32>} : memref<1x128xf32, #tpu.memory_space<vmem>>, vector<1x128xf32>,
      %c0_18 = arith.constant 0 : index
      %c0_19 = arith.constant 0 : index
      %40 = vector.load %arg5[%c0_18, %c0_19] : memref<1x128xf32, #tpu.memory_space<vmem>>, vector<1x128xf32>
      %cst_20 = arith.constant dense<0.000000e+00> : vector<128xf32>
      %41 = vector.multi_reduction <add>, %33, %cst_20 [0] : vector<16x128xf32> to vector<128xf32>
      %42 = vector.shape_cast %41 : vector<128xf32> to vector<1x128xf32>
      %43 = arith.addf %40, %42 : vector<1x128xf32>
      %c0_21 = arith.constant 0 : index
      %c0_22 = arith.constant 0 : index
      %44 = vector.load %arg5[%c0_21, %c0_22] : memref<1x128xf32, #tpu.memory_space<vmem>>, vector<1x128xf32>
      tpu.vector_store %arg5[%c0_21, %c0_22], %43 {strides = array<i32>} : memref<1x128xf32, #tpu.memory_space<vmem>>, vector<1x128xf32>,
      %c0_23 = arith.constant 0 : index
      %c0_24 = arith.constant 0 : index
      %45 = vector.load %arg6[%c0_23, %c0_24] : memref<1x128xf32, #tpu.memory_space<vmem>>, vector<1x128xf32>
      %cst_25 = arith.constant dense<0.000000e+00> : vector<128xf32>
      %46 = vector.multi_reduction <add>, %34, %cst_25 [0] : vector<16x128xf32> to vector<128xf32>
      %47 = vector.shape_cast %46 : vector<128xf32> to vector<1x128xf32>
      %48 = arith.addf %45, %47 : vector<1x128xf32>
      %c0_26 = arith.constant 0 : index
      %c0_27 = arith.constant 0 : index
      %49 = vector.load %arg6[%c0_26, %c0_27] : memref<1x128xf32, #tpu.memory_space<vmem>>, vector<1x128xf32>
      tpu.vector_store %arg6[%c0_26, %c0_27], %48 {strides = array<i32>} : memref<1x128xf32, #tpu.memory_space<vmem>>, vector<1x128xf32>,
      %c0_28 = arith.constant 0 : index
      %c0_29 = arith.constant 0 : index
      %50 = vector.load %arg7[%c0_28, %c0_29] : memref<1x128xf32, #tpu.memory_space<vmem>>, vector<1x128xf32>
      %cst_30 = arith.constant dense<0.000000e+00> : vector<128xf32>
      %51 = vector.multi_reduction <add>, %32, %cst_30 [0] : vector<16x128xf32> to vector<128xf32>
      %52 = vector.shape_cast %51 : vector<128xf32> to vector<1x128xf32>
      %53 = arith.addf %50, %52 : vector<1x128xf32>
      %c0_31 = arith.constant 0 : index
      %c0_32 = arith.constant 0 : index
      %54 = vector.load %arg7[%c0_31, %c0_32] : memref<1x128xf32, #tpu.memory_space<vmem>>, vector<1x128xf32>
      tpu.vector_store %arg7[%c0_31, %c0_32], %53 {strides = array<i32>} : memref<1x128xf32, #tpu.memory_space<vmem>>, vector<1x128xf32>,
    } else {
    }
    %c0_i32_3 = arith.constant 0 : i32
    %6 = arith.cmpi eq, %arg0, %c0_i32_3 : i32
    %7 = arith.extui %6 : i1 to i32
    %c0_i32_4 = arith.constant 0 : i32
    %8 = arith.cmpi ne, %7, %c0_i32_4 : i32
    scf.if %8 {
      %c0 = arith.constant 0 : index
      %c0_5 = arith.constant 0 : index
      %9 = vector.load %arg1[%c0, %c0_5] : memref<16x128xf32, #tpu.memory_space<vmem>>, vector<16x128xf32>
      %c0_6 = arith.constant 0 : index
      %c0_7 = arith.constant 0 : index
      %10 = vector.load %arg2[%c0_6, %c0_7] : memref<16x128xf32, #tpu.memory_space<vmem>>, vector<16x128xf32>
      %11 = math.absf %9 : vector<16x128xf32>
      %cst = arith.constant 0.000000e+00 : f32
      %12 = vector.broadcast %cst : f32 to vector<16x128xf32>
      %13 = arith.subf %12, %11 : vector<16x128xf32>
      %14 = math.exp %13 : vector<16x128xf32>
      %cst_8 = arith.constant 0.000000e+00 : f32
      %15 = vector.broadcast %cst_8 : f32 to vector<16x128xf32>
      %16 = arith.maximumf %9, %15 : vector<16x128xf32>
      %17 = arith.mulf %9, %10 : vector<16x128xf32>
      %18 = arith.subf %16, %17 : vector<16x128xf32>
      %19 = math.log1p %14 : vector<16x128xf32>
      %20 = arith.addf %18, %19 : vector<16x128xf32>
      %cst_9 = arith.constant 1.000000e+00 : f32
      %21 = vector.broadcast %cst_9 : f32 to vector<16x128xf32>
      %22 = arith.addf %21, %14 : vector<16x128xf32>
      %cst_10 = arith.constant 1.000000e+00 : f32
      %23 = vector.broadcast %cst_10 : f32 to vector<16x128xf32>
      %24 = arith.divf %23, %22 : vector<16x128xf32>
      %cst_11 = arith.constant 0.000000e+00 : f32
      %25 = vector.broadcast %cst_11 : f32 to vector<16x128xf32>
      %26 = arith.cmpf oge, %9, %25 : vector<16x128xf32>
      %27 = arith.mulf %14, %24 : vector<16x128xf32>
      %28 = arith.select %26, %24, %27 : vector<16x128xi1>, vector<16x128xf32>
      %cst_12 = arith.constant 5.000000e-01 : f32
      %29 = vector.broadcast %cst_12 : f32 to vector<16x128xf32>
      %30 = arith.cmpf ogt, %10, %29 : vector<16x128xf32>
      %31 = arith.extui %30 : vector<16x128xi1> to vector<16x128xi32>
      %32 = arith.sitofp %31 : vector<16x128xi32> to vector<16x128xf32>
      %33 = arith.mulf %28, %32 : vector<16x128xf32>
      %34 = arith.mulf %28, %28 : vector<16x128xf32>
      %c2048_i32 = arith.constant 2048 : i32
      %35 = arith.muli %arg0, %c2048_i32 : i32
      %36 = tpu.iota {dimensions = array<i32: 0>} : vector<16x128xi32>
      %c128_i32 = arith.constant 128 : i32
      %37 = vector.broadcast %c128_i32 : i32 to vector<16x128xi32>
      %38 = arith.muli %36, %37 : vector<16x128xi32>
      %39 = vector.broadcast %35 : i32 to vector<16x128xi32>
      %40 = arith.addi %39, %38 : vector<16x128xi32>
      %41 = tpu.iota {dimensions = array<i32: 1>} : vector<16x128xi32>
      %42 = arith.addi %40, %41 : vector<16x128xi32>
      %c2048_i32_13 = arith.constant 2048 : i32
      %43 = vector.broadcast %c2048_i32_13 : i32 to vector<16x128xi32>
      %44 = arith.cmpi slt, %42, %43 : vector<16x128xi32>
      %cst_14 = arith.constant 0.000000e+00 : f32
      %45 = vector.broadcast %cst_14 : f32 to vector<16x128xf32>
      %46 = arith.select %44, %20, %45 : vector<16x128xi1>, vector<16x128xf32>
      %cst_15 = arith.constant 0.000000e+00 : f32
      %47 = vector.broadcast %cst_15 : f32 to vector<16x128xf32>
      %48 = arith.select %44, %33, %47 : vector<16x128xi1>, vector<16x128xf32>
      %cst_16 = arith.constant 0.000000e+00 : f32
      %49 = vector.broadcast %cst_16 : f32 to vector<16x128xf32>
      %50 = arith.select %44, %34, %49 : vector<16x128xi1>, vector<16x128xf32>
      %cst_17 = arith.constant 0.000000e+00 : f32
      %51 = vector.broadcast %cst_17 : f32 to vector<16x128xf32>
      %52 = arith.select %44, %32, %51 : vector<16x128xi1>, vector<16x128xf32>
      %c0_18 = arith.constant 0 : index
      %c0_19 = arith.constant 0 : index
      %53 = vector.load %arg4[%c0_18, %c0_19] : memref<1x128xf32, #tpu.memory_space<vmem>>, vector<1x128xf32>
      %cst_20 = arith.constant dense<0.000000e+00> : vector<128xf32>
      %54 = vector.multi_reduction <add>, %46, %cst_20 [0] : vector<16x128xf32> to vector<128xf32>
      %55 = vector.shape_cast %54 : vector<128xf32> to vector<1x128xf32>
      %56 = arith.addf %53, %55 : vector<1x128xf32>
      %c0_21 = arith.constant 0 : index
      %c0_22 = arith.constant 0 : index
      %57 = vector.load %arg4[%c0_21, %c0_22] : memref<1x128xf32, #tpu.memory_space<vmem>>, vector<1x128xf32>
      tpu.vector_store %arg4[%c0_21, %c0_22], %56 {strides = array<i32>} : memref<1x128xf32, #tpu.memory_space<vmem>>, vector<1x128xf32>,
      %c0_23 = arith.constant 0 : index
      %c0_24 = arith.constant 0 : index
      %58 = vector.load %arg5[%c0_23, %c0_24] : memref<1x128xf32, #tpu.memory_space<vmem>>, vector<1x128xf32>
      %cst_25 = arith.constant dense<0.000000e+00> : vector<128xf32>
      %59 = vector.multi_reduction <add>, %48, %cst_25 [0] : vector<16x128xf32> to vector<128xf32>
      %60 = vector.shape_cast %59 : vector<128xf32> to vector<1x128xf32>
      %61 = arith.addf %58, %60 : vector<1x128xf32>
      %c0_26 = arith.constant 0 : index
      %c0_27 = arith.constant 0 : index
      %62 = vector.load %arg5[%c0_26, %c0_27] : memref<1x128xf32, #tpu.memory_space<vmem>>, vector<1x128xf32>
      tpu.vector_store %arg5[%c0_26, %c0_27], %61 {strides = array<i32>} : memref<1x128xf32, #tpu.memory_space<vmem>>, vector<1x128xf32>,
      %c0_28 = arith.constant 0 : index
      %c0_29 = arith.constant 0 : index
      %63 = vector.load %arg6[%c0_28, %c0_29] : memref<1x128xf32, #tpu.memory_space<vmem>>, vector<1x128xf32>
      %cst_30 = arith.constant dense<0.000000e+00> : vector<128xf32>
      %64 = vector.multi_reduction <add>, %50, %cst_30 [0] : vector<16x128xf32> to vector<128xf32>
      %65 = vector.shape_cast %64 : vector<128xf32> to vector<1x128xf32>
      %66 = arith.addf %63, %65 : vector<1x128xf32>
      %c0_31 = arith.constant 0 : index
      %c0_32 = arith.constant 0 : index
      %67 = vector.load %arg6[%c0_31, %c0_32] : memref<1x128xf32, #tpu.memory_space<vmem>>, vector<1x128xf32>
      tpu.vector_store %arg6[%c0_31, %c0_32], %66 {strides = array<i32>} : memref<1x128xf32, #tpu.memory_space<vmem>>, vector<1x128xf32>,
      %c0_33 = arith.constant 0 : index
      %c0_34 = arith.constant 0 : index
      %68 = vector.load %arg7[%c0_33, %c0_34] : memref<1x128xf32, #tpu.memory_space<vmem>>, vector<1x128xf32>
      %cst_35 = arith.constant dense<0.000000e+00> : vector<128xf32>
      %69 = vector.multi_reduction <add>, %52, %cst_35 [0] : vector<16x128xf32> to vector<128xf32>
      %70 = vector.shape_cast %69 : vector<128xf32> to vector<1x128xf32>
      %71 = arith.addf %68, %70 : vector<1x128xf32>
      %c0_36 = arith.constant 0 : index
      %c0_37 = arith.constant 0 : index
      %72 = vector.load %arg7[%c0_36, %c0_37] : memref<1x128xf32, #tpu.memory_space<vmem>>, vector<1x128xf32>
      tpu.vector_store %arg7[%c0_36, %c0_37], %71 {strides = array<i32>} : memref<1x128xf32, #tpu.memory_space<vmem>>, vector<1x128xf32>,
      %c0_38 = arith.constant 0 : index
      %c0_39 = arith.constant 0 : index
      %73 = vector.load %arg4[%c0_38, %c0_39] : memref<1x128xf32, #tpu.memory_space<vmem>>, vector<1x128xf32>
      %74 = vector.shape_cast %73 : vector<1x128xf32> to vector<1x1x128xf32>
      %cst_40 = arith.constant dense<0.000000e+00> : vector<1xf32>
      %75 = vector.multi_reduction <add>, %74, %cst_40 [1, 2] : vector<1x1x128xf32> to vector<1xf32>
      %76 = vector.shape_cast %75 : vector<1xf32> to vector<1x1x1xf32>
      %77 = vector.extract %76[0, 0, 0] : f32 from vector<1x1x1xf32>
      %78 = vector.broadcast %77 : f32 to vector<1x1xf32>
      %cst_41 = arith.constant 2.048000e+03 : f32
      %79 = vector.broadcast %cst_41 : f32 to vector<1x1xf32>
      %80 = arith.divf %78, %79 : vector<1x1xf32>
      %c0_42 = arith.constant 0 : index
      %c0_43 = arith.constant 0 : index
      %81 = vector.load %arg5[%c0_42, %c0_43] : memref<1x128xf32, #tpu.memory_space<vmem>>, vector<1x128xf32>
      %82 = vector.shape_cast %81 : vector<1x128xf32> to vector<1x1x128xf32>
      %cst_44 = arith.constant dense<0.000000e+00> : vector<1xf32>
      %83 = vector.multi_reduction <add>, %82, %cst_44 [1, 2] : vector<1x1x128xf32> to vector<1xf32>
      %84 = vector.shape_cast %83 : vector<1xf32> to vector<1x1x1xf32>
      %85 = vector.extract %84[0, 0, 0] : f32 from vector<1x1x1xf32>
      %86 = vector.broadcast %85 : f32 to vector<1x1xf32>
      %cst_45 = arith.constant 2.000000e+00 : f32
      %87 = vector.broadcast %cst_45 : f32 to vector<1x1xf32>
      %88 = arith.mulf %87, %86 : vector<1x1xf32>
      %cst_46 = arith.constant 9.99999974E-6 : f32
      %89 = vector.broadcast %cst_46 : f32 to vector<1x1xf32>
      %90 = arith.addf %88, %89 : vector<1x1xf32>
      %c0_47 = arith.constant 0 : index
      %c0_48 = arith.constant 0 : index
      %91 = vector.load %arg6[%c0_47, %c0_48] : memref<1x128xf32, #tpu.memory_space<vmem>>, vector<1x128xf32>
      %92 = vector.shape_cast %91 : vector<1x128xf32> to vector<1x1x128xf32>
      %cst_49 = arith.constant dense<0.000000e+00> : vector<1xf32>
      %93 = vector.multi_reduction <add>, %92, %cst_49 [1, 2] : vector<1x1x128xf32> to vector<1xf32>
      %94 = vector.shape_cast %93 : vector<1xf32> to vector<1x1x1xf32>
      %95 = vector.extract %94[0, 0, 0] : f32 from vector<1x1x1xf32>
      %96 = vector.broadcast %95 : f32 to vector<1x1xf32>
      %c0_50 = arith.constant 0 : index
      %c0_51 = arith.constant 0 : index
      %97 = vector.load %arg7[%c0_50, %c0_51] : memref<1x128xf32, #tpu.memory_space<vmem>>, vector<1x128xf32>
      %98 = vector.shape_cast %97 : vector<1x128xf32> to vector<1x1x128xf32>
      %cst_52 = arith.constant dense<0.000000e+00> : vector<1xf32>
      %99 = vector.multi_reduction <add>, %98, %cst_52 [1, 2] : vector<1x1x128xf32> to vector<1xf32>
      %100 = vector.shape_cast %99 : vector<1xf32> to vector<1x1x1xf32>
      %101 = vector.extract %100[0, 0, 0] : f32 from vector<1x1x1xf32>
      %102 = vector.broadcast %101 : f32 to vector<1x1xf32>
      %103 = arith.addf %96, %102 : vector<1x1xf32>
      %cst_53 = arith.constant 9.99999974E-6 : f32
      %104 = vector.broadcast %cst_53 : f32 to vector<1x1xf32>
      %105 = arith.addf %103, %104 : vector<1x1xf32>
      %106 = arith.divf %90, %105 : vector<1x1xf32>
      %107 = arith.subf %80, %106 : vector<1x1xf32>
      %c0_54 = arith.constant 0 : index
      %c0_55 = arith.constant 0 : index
      %108 = vector.load %arg3[%c0_54, %c0_55] : memref<1x1xf32, #tpu.memory_space<vmem>>, vector<1x1xf32>
      tpu.vector_store %arg3[%c0_54, %c0_55], %107 {strides = array<i32>} : memref<1x1xf32, #tpu.memory_space<vmem>>, vector<1x1xf32>,
    } else {
    }
    return
  }
  func.func @transform_0(%arg0: i32) -> (i32, i32) {
    %c0_i32 = arith.constant 0 : i32
    %c0_i32_0 = arith.constant 0 : i32
    return %arg0, %c0_i32 : i32, i32
  }
  func.func @transform_1(%arg0: i32) -> (i32, i32) {
    %c0_i32 = arith.constant 0 : i32
    %c0_i32_0 = arith.constant 0 : i32
    return %arg0, %c0_i32 : i32, i32
  }
  func.func @transform_2(%arg0: i32) -> (i32, i32) {
    %c0_i32 = arith.constant 0 : i32
    %c0_i32_0 = arith.constant 0 : i32
    %c0_i32_1 = arith.constant 0 : i32
    return %c0_i32, %c0_i32_0 : i32, i32
  }
}

</mosaic_0001>

<llo_original>
// kernel: tpu_custom_call.1
$region0: #{tpu_custom_call.1}
  #allocation0 [shape = 'u32[]', space=smem, size = 0x4, offset = 0x4, fixed_abs, tag = 'smem constant byte address 0x4 - core index']
  #allocation1 [shape = 'u32[144,128]{1,0:T(1,128)}', space=vmem, size = 0x12000, scoped, tag = 'internal scratch']
  #allocation2 [shape = 'f32[1,128]{1,0:T(1,128)}', space=vmem, size = 0x200, scoped, tag = 'scratch operand']
  #allocation3 [shape = 'f32[1,128]{1,0:T(1,128)}', space=vmem, size = 0x200, scoped, tag = 'scratch operand']
  #allocation4 [shape = 'f32[1,128]{1,0:T(1,128)}', space=vmem, size = 0x200, scoped, tag = 'scratch operand']
  #allocation5 [shape = 'f32[1,128]{1,0:T(1,128)}', space=vmem, size = 0x200, scoped, tag = 'scratch operand']
  %s0 = inlined_call_operand.hbm [shape: f32[16,128], index: 0, kind: input, shape index: {}]
  %s1 = inlined_call_operand.hbm [shape: f32[16,128], index: 1, kind: input, shape index: {}]
  %s2 = inlined_call_operand.hbm [shape: f32[1,1], index: 2, kind: output, shape index: {}]
  %s3 = sld [smem:[#allocation0]]
  $region38: #{tpu_custom_call.1} parent=0
    _
  %s5 = ssub.s32 1, %s3
  %s6 = scalar_select 0, %s5, %s3
  $region1: #{tpu_custom_call.1} parent=0
    #allocation6 [shape = 'u8[8192]{0}', space=vmem, size = 0x2000, scoped, tag = 'input window, operand 0, single buffered']
    #allocation7 [shape = 's32[1]{0}', space=sflag, size = 0x4, scoped, tag = 'scoped memory for tpu_custom_call.1']
    #allocation8 [shape = 's32[1]{0}', space=sflag, size = 0x4, scoped, tag = 'scoped memory for tpu_custom_call.1']
    #allocation9 [shape = 'u8[8192]{0}', space=vmem, size = 0x2000, scoped, tag = 'input window, operand 1, single buffered']
    #allocation10 [shape = 's32[1]{0}', space=sflag, size = 0x4, scoped, tag = 'scoped memory for tpu_custom_call.1']
    #allocation11 [shape = 'u8[512]{0}', space=vmem, size = 0x400, scoped, tag = 'output window, operand 0, single buffered']
    %7 = vsyncpa [#allocation7], 0
    %8 = vsyncpa [#allocation10], 0
    %9 = vsyncpa [#allocation8], 0
    // Predicated region
    $region2: #{tpu_custom_call.1} parent=1 // pred_check
      _
    $region3: #{tpu_custom_call.1} parent=1 // pred_check_branch
      %11 = sbr.rel (0) target = $region5
    $region4: #{tpu_custom_call.1} parent=1 // pred_region
      %s13 = ssub.s32 256, 256
      %14 = vsyncadd [#allocation7], %s13
      %s15 = sshll.u32 [#allocation6], 4
      %s16 = int_to_ptr.vmem [resolvable:$true] %s15
      %21 = dma.hbm_to_vmem [thread:$0]  %s0, 256, %s16, [#allocation7], 128, 128, 8
    $region5: #{tpu_custom_call.1} parent=1 // pred_fallthru
      _
    // Predicated region
    $region6: #{tpu_custom_call.1} parent=1 // pred_check
      _
    $region7: #{tpu_custom_call.1} parent=1 // pred_check_branch
      %23 = sbr.rel (0) target = $region9
    $region8: #{tpu_custom_call.1} parent=1 // pred_region
      %s25 = ssub.s32 256, 256
      %26 = vsyncadd [#allocation10], %s25
      %s27 = sshll.u32 [#allocation9], 4
      %s28 = int_to_ptr.vmem [resolvable:$true] %s27
      %33 = dma.hbm_to_vmem [thread:$0]  %s1, 256, %s28, [#allocation10], 128, 128, 8
    $region9: #{tpu_custom_call.1} parent=1 // pred_fallthru
      _
    // Predicated region
    $region10: #{tpu_custom_call.1} parent=1 // pred_check
      _
    $region11: #{tpu_custom_call.1} parent=1 // pred_check_branch
      %35 = sbr.rel (0) target = $region13
    $region12: #{tpu_custom_call.1} parent=1 // pred_region
      %36 = dma.done [#allocation7], 256
    $region13: #{tpu_custom_call.1} parent=1 // pred_fallthru
      _
    // Predicated region
    $region14: #{tpu_custom_call.1} parent=1 // pred_check
      _
    $region15: #{tpu_custom_call.1} parent=1 // pred_check_branch
      %38 = sbr.rel (0) target = $region17
    $region16: #{tpu_custom_call.1} parent=1 // pred_region
      %39 = dma.done [#allocation10], 256
    $region17: #{tpu_custom_call.1} parent=1 // pred_fallthru
      _
    %p40 = scmp.eq.s32.totalorder 0, 0
    // Predicated region
    $region18: #{tpu_custom_call.1} parent=1 // pred_check
      %p41 = pneg %p40
    $region19: #{tpu_custom_call.1} parent=1 // pred_check_branch
      %43 = sbr.rel (%p41) target = $region21
    $region20: #{tpu_custom_call.1} parent=1 // pred_region
      %44 = vst [vmem:[#allocation2] sm:$0x1] 0.0
      %45 = vst [vmem:[#allocation3] sm:$0x1] 0.0
      %46 = vst [vmem:[#allocation4] sm:$0x1] 0.0
      %47 = vst [vmem:[#allocation5] sm:$0x1] 0.0
    $region21: #{tpu_custom_call.1} parent=1 // pred_fallthru
      _
    %p48 = scmp.lt.s32.totalorder 0, 0
    // Predicated region
    $region22: #{tpu_custom_call.1} parent=1 // pred_check
      %p49 = pneg %p48
    $region23: #{tpu_custom_call.1} parent=1 // pred_check_branch
      %51 = sbr.rel (%p49) target = $region25
    $region24: #{tpu_custom_call.1} parent=1 // pred_region
      %v52 = vld [vmem:[#allocation6] sm:$0xff]
      %v53 = vld [vmem:[#allocation6 + $0x8] sm:$0xff]
      %v54 = vld [vmem:[#allocation9] sm:$0xff]
      %v55 = vld [vmem:[#allocation9 + $0x8] sm:$0xff]
      %v56 = vand.u32 2147483647, %v52
      %v57 = vand.u32 2147483647, %v53
      %v58 = vsub.f32 0.0, %v56
      %v59 = vsub.f32 0.0, %v57
      %v60 = vmul.f32 %v58, 1.442695
      %v61 = vpow.pop %v60
      %v62 = vmul.f32 %v59, 1.442695
      %v63 = vpow.pop %v62
      %v64 = vmax.f32 %v52, 0.0
      %v65 = vmax.f32 %v53, 0.0
      %v66 = vmul.f32 %v52, %v54
      %v67 = vmul.f32 %v53, %v55
      %v68 = vsub.f32 %v64, %v66
      %v69 = vsub.f32 %v65, %v67
      %v70 = vadd.f32 %v61, 1.0
      %v71 = vlog2.pop %v70
      %v72 = vmul.f32 %v71, 0.6931472
      %v73 = vmul.f32 -0.5, %v61
      %v74 = vadd.f32 %v73, 1.0
      %v75 = vmul.f32 %v74, %v61
      %v76 = vand.u32 2147483647, %v61
      %vm77 = vcmp.lt.f32.partialorder %v76, 0.0004427343
      %v78 = vsel %vm77, %v75, %v72
      %v79 = vadd.f32 %v63, 1.0
      %v80 = vlog2.pop %v79
      %v81 = vmul.f32 %v80, 0.6931472
      %v82 = vmul.f32 -0.5, %v63
      %v83 = vadd.f32 %v82, 1.0
      %v84 = vmul.f32 %v83, %v63
      %v85 = vand.u32 2147483647, %v63
      %vm86 = vcmp.lt.f32.partialorder %v85, 0.0004427343
      %v87 = vsel %vm86, %v84, %v81
      %v88 = vadd.f32 %v68, %v78
      %v89 = vadd.f32 %v69, %v87
      %v90 = vadd.f32 %v61, 1.0
      %v91 = vadd.f32 %v63, 1.0
      %v92 = vrcp.pop %v90
      %v93 = vmul.f32 1.0, %v92
      %v94 = vrcp.pop %v91
      %v95 = vmul.f32 1.0, %v94
      %vm96 = vcmp.ge.f32.partialorder %v52, 0.0
      %vm97 = vcmp.ge.f32.partialorder %v53, 0.0
      %v98 = vmul.f32 %v61, %v93
      %v99 = vmul.f32 %v63, %v95
      %v100 = vsel %vm96, %v93, %v98
      %v101 = vsel %vm97, %v95, %v99
      %vm102 = vcmp.gt.f32.partialorder %v54, 0.5
      %vm103 = vcmp.gt.f32.partialorder %v55, 0.5
      %v104 = vsel %vm102, 1, 0
      %v105 = vsel %vm103, 1, 0
      %v106 = vcvt.s32.f32 %v104
      %v107 = vcvt.s32.f32 %v105
      %v108 = vmul.f32 %v100, %v106
      %v109 = vmul.f32 %v101, %v107
      %v110 = vmul.f32 %v100, %v100
      %v111 = vmul.f32 %v101, %v101
      %v112 = vld [vmem:[#allocation2] sm:$0x1]
      %v113 = vadd.f32 %v88, %v89
      %v114 = vrot.slane %v113, 4
      %v115 = vadd.f32 %v113, %v114
      %v116 = vrot.slane %v115, 2
      %v117 = vadd.f32 %v115, %v116
      %v118 = vrot.slane %v117, 1
      %v119 = vadd.f32 %v117, %v118
      %v120 = vadd.f32 %v112, %v119
      %121 = vst [vmem:[#allocation2] sm:$0x1] %v120
      %v122 = vld [vmem:[#allocation3] sm:$0x1]
      %v123 = vadd.f32 %v108, %v109
      %v124 = vrot.slane %v123, 4
      %v125 = vadd.f32 %v123, %v124
      %v126 = vrot.slane %v125, 2
      %v127 = vadd.f32 %v125, %v126
      %v128 = vrot.slane %v127, 1
      %v129 = vadd.f32 %v127, %v128
      %v130 = vadd.f32 %v122, %v129
      %131 = vst [vmem:[#allocation3] sm:$0x1] %v130
      %v132 = vld [vmem:[#allocation4] sm:$0x1]
      %v133 = vadd.f32 %v110, %v111
      %v134 = vrot.slane %v133, 4
      %v135 = vadd.f32 %v133, %v134
      %v136 = vrot.slane %v135, 2
      %v137 = vadd.f32 %v135, %v136
      %v138 = vrot.slane %v137, 1
      %v139 = vadd.f32 %v137, %v138
      %v140 = vadd.f32 %v132, %v139
      %141 = vst [vmem:[#allocation4] sm:$0x1] %v140
      %v142 = vld [vmem:[#allocation5] sm:$0x1]
      %v143 = vadd.f32 %v106, %v107
      %v144 = vrot.slane %v143, 4
      %v145 = vadd.f32 %v143, %v144
      %v146 = vrot.slane %v145, 2
      %v147 = vadd.f32 %v145, %v146
      %v148 = vrot.slane %v147, 1
      %v149 = vadd.f32 %v147, %v148
      %v150 = vadd.f32 %v142, %v149
      %151 = vst [vmem:[#allocation5] sm:$0x1] %v150
    $region25: #{tpu_custom_call.1} parent=1 // pred_fallthru
      _
    // Predicated region
    $region26: #{tpu_custom_call.1} parent=1 // pred_check
      %p152 = pneg %p40
    $region27: #{tpu_custom_call.1} parent=1 // pred_check_branch
      %154 = sbr.rel (%p152) target = $region29
    $region28: #{tpu_custom_call.1} parent=1 // pred_region
      %v155 = vld [vmem:[#allocation6] sm:$0xff]
      %v156 = vld [vmem:[#allocation6 + $0x8] sm:$0xff]
      %v157 = vld [vmem:[#allocation9] sm:$0xff]
      %v158 = vld [vmem:[#allocation9 + $0x8] sm:$0xff]
      %v159 = vand.u32 2147483647, %v155
      %v160 = vand.u32 2147483647, %v156
      %v161 = vsub.f32 0.0, %v159
      %v162 = vsub.f32 0.0, %v160
      %v163 = vmul.f32 %v161, 1.442695
      %v164 = vpow.pop %v163
      %v165 = vmul.f32 %v162, 1.442695
      %v166 = vpow.pop %v165
      %v167 = vmax.f32 %v155, 0.0
      %v168 = vmax.f32 %v156, 0.0
      %v169 = vmul.f32 %v155, %v157
      %v170 = vmul.f32 %v156, %v158
      %v171 = vsub.f32 %v167, %v169
      %v172 = vsub.f32 %v168, %v170
      %v173 = vadd.f32 %v164, 1.0
      %v174 = vlog2.pop %v173
      %v175 = vmul.f32 %v174, 0.6931472
      %v176 = vmul.f32 -0.5, %v164
      %v177 = vadd.f32 %v176, 1.0
      %v178 = vmul.f32 %v177, %v164
      %v179 = vand.u32 2147483647, %v164
      %vm180 = vcmp.lt.f32.partialorder %v179, 0.0004427343
      %v181 = vsel %vm180, %v178, %v175
      %v182 = vadd.f32 %v166, 1.0
      %v183 = vlog2.pop %v182
      %v184 = vmul.f32 %v183, 0.6931472
      %v185 = vmul.f32 -0.5, %v166
      %v186 = vadd.f32 %v185, 1.0
      %v187 = vmul.f32 %v186, %v166
      %v188 = vand.u32 2147483647, %v166
      %vm189 = vcmp.lt.f32.partialorder %v188, 0.0004427343
      %v190 = vsel %vm189, %v187, %v184
      %v191 = vadd.f32 %v171, %v181
      %v192 = vadd.f32 %v172, %v190
      %v193 = vadd.f32 %v164, 1.0
      %v194 = vadd.f32 %v166, 1.0
      %v195 = vrcp.pop %v193
      %v196 = vmul.f32 1.0, %v195
      %v197 = vrcp.pop %v194
      %v198 = vmul.f32 1.0, %v197
      %vm199 = vcmp.ge.f32.partialorder %v155, 0.0
      %vm200 = vcmp.ge.f32.partialorder %v156, 0.0
      %v201 = vmul.f32 %v164, %v196
      %v202 = vmul.f32 %v166, %v198
      %v203 = vsel %vm199, %v196, %v201
      %v204 = vsel %vm200, %v198, %v202
      %vm205 = vcmp.gt.f32.partialorder %v157, 0.5
      %vm206 = vcmp.gt.f32.partialorder %v158, 0.5
      %v207 = vsel %vm205, 1, 0
      %v208 = vsel %vm206, 1, 0
      %v209 = vcvt.s32.f32 %v207
      %v210 = vcvt.s32.f32 %v208
      %v211 = vmul.f32 %v203, %v209
      %v212 = vmul.f32 %v204, %v210
      %v213 = vmul.f32 %v203, %v203
      %v214 = vmul.f32 %v204, %v204
      %s215 = smul.u32 0, 2048
      %v216 = vlaneseq
      %v217 = vshrl.u32 %v216, 7
      %v218 = vadd.s32 %v217, 8
      %v219 = vmul.u32 %v217, 128
      %v220 = vmul.u32 %v218, 128
      %v221 = vstv %s215
      %v222 = vadd.s32 %v221, %v219
      %v223 = vadd.s32 %v221, %v220
      %v224 = vlaneseq
      %v225 = vand.u32 %v224, 127
      %v226 = vadd.s32 %v222, %v225
      %v227 = vadd.s32 %v223, %v225
      %vm228 = vcmp.lt.s32.totalorder %v226, 2048
      %vm229 = vcmp.lt.s32.totalorder %v227, 2048
      %v230 = vsel %vm228, %v191, 0.0
      %v231 = vsel %vm229, %v192, 0.0
      %v232 = vsel %vm228, %v211, 0.0
      %v233 = vsel %vm229, %v212, 0.0
      %v234 = vsel %vm228, %v213, 0.0
      %v235 = vsel %vm229, %v214, 0.0
      %v236 = vsel %vm228, %v209, 0.0
      %v237 = vsel %vm229, %v210, 0.0
      %v238 = vld [vmem:[#allocation2] sm:$0x1]
      %v239 = vadd.f32 %v230, %v231
      %v240 = vrot.slane %v239, 4
      %v241 = vadd.f32 %v239, %v240
      %v242 = vrot.slane %v241, 2
      %v243 = vadd.f32 %v241, %v242
      %v244 = vrot.slane %v243, 1
      %v245 = vadd.f32 %v243, %v244
      %v246 = vadd.f32 %v238, %v245
      %247 = vst [vmem:[#allocation2] sm:$0x1] %v246
      %v248 = vld [vmem:[#allocation3] sm:$0x1]
      %v249 = vadd.f32 %v232, %v233
      %v250 = vrot.slane %v249, 4
      %v251 = vadd.f32 %v249, %v250
      %v252 = vrot.slane %v251, 2
      %v253 = vadd.f32 %v251, %v252
      %v254 = vrot.slane %v253, 1
      %v255 = vadd.f32 %v253, %v254
      %v256 = vadd.f32 %v248, %v255
      %257 = vst [vmem:[#allocation3] sm:$0x1] %v256
      %v258 = vld [vmem:[#allocation4] sm:$0x1]
      %v259 = vadd.f32 %v234, %v235
      %v260 = vrot.slane %v259, 4
      %v261 = vadd.f32 %v259, %v260
      %v262 = vrot.slane %v261, 2
      %v263 = vadd.f32 %v261, %v262
      %v264 = vrot.slane %v263, 1
      %v265 = vadd.f32 %v263, %v264
      %v266 = vadd.f32 %v258, %v265
      %267 = vst [vmem:[#allocation4] sm:$0x1] %v266
      %v268 = vld [vmem:[#allocation5] sm:$0x1]
      %v269 = vadd.f32 %v236, %v237
      %v270 = vrot.slane %v269, 4
      %v271 = vadd.f32 %v269, %v270
      %v272 = vrot.slane %v271, 2
      %v273 = vadd.f32 %v271, %v272
      %v274 = vrot.slane %v273, 1
      %v275 = vadd.f32 %v273, %v274
      %v276 = vadd.f32 %v268, %v275
      %277 = vst [vmem:[#allocation5] sm:$0x1] %v276
      %v278 = vld [vmem:[#allocation2] sm:$0x1]
      %vm279 = vcmask 1040384
      %v280 = vsel %vm279, %v278, 0.0
      %281 = vadd.xlane.f32.xlu0 %v280
      %v282 = vpop.xlane.xlu0 %281
      %v283 = vrot.slane %v282, 4
      %v284 = vadd.f32 %v282, %v283
      %v285 = vrot.slane %v284, 2
      %v286 = vadd.f32 %v284, %v285
      %v287 = vrot.slane %v286, 1
      %v288 = vadd.f32 %v286, %v287
      %s289 = vtos %v288
      %v290 = vstv %s289
      %v291 = vrcp.pop 2048.0
      %v292 = vmul.f32 %v290, %v291
      %v293 = vld [vmem:[#allocation3] sm:$0x1]
      %v294 = vsel %vm279, %v293, 0.0
      %295 = vadd.xlane.f32.xlu0 %v294
      %v296 = vpop.xlane.xlu0 %295
      %v297 = vrot.slane %v296, 4
      %v298 = vadd.f32 %v296, %v297
      %v299 = vrot.slane %v298, 2
      %v300 = vadd.f32 %v298, %v299
      %v301 = vrot.slane %v300, 1
      %v302 = vadd.f32 %v300, %v301
      %s303 = vtos %v302
      %v304 = vstv %s303
      %v305 = vmul.f32 %v304, 2.0
      %v306 = vadd.f32 %v305, 1e-05
      %v307 = vld [vmem:[#allocation4] sm:$0x1]
      %v308 = vsel %vm279, %v307, 0.0
      %309 = vadd.xlane.f32.xlu0 %v308
      %v310 = vpop.xlane.xlu0 %309
      %v311 = vrot.slane %v310, 4
      %v312 = vadd.f32 %v310, %v311
      %v313 = vrot.slane %v312, 2
      %v314 = vadd.f32 %v312, %v313
      %v315 = vrot.slane %v314, 1
      %v316 = vadd.f32 %v314, %v315
      %s317 = vtos %v316
      %v318 = vstv %s317
      %v319 = vld [vmem:[#allocation5] sm:$0x1]
      %v320 = vsel %vm279, %v319, 0.0
      %321 = vadd.xlane.f32.xlu0 %v320
      %v322 = vpop.xlane.xlu0 %321
      %v323 = vrot.slane %v322, 4
      %v324 = vadd.f32 %v322, %v323
      %v325 = vrot.slane %v324, 2
      %v326 = vadd.f32 %v324, %v325
      %v327 = vrot.slane %v326, 1
      %v328 = vadd.f32 %v326, %v327
      %s329 = vtos %v328
      %v330 = vstv %s329
      %v331 = vadd.f32 %v318, %v330
      %v332 = vadd.f32 %v331, 1e-05
      %v333 = vrcp.pop %v332
      %v334 = vmul.f32 %v306, %v333
      %v335 = vsub.f32 %v292, %v334
      %vm336 = vcmask 0
      %337 = vst.msk [vmem:[#allocation11] sm:$0x1] %vm336, %v335
    $region29: #{tpu_custom_call.1} parent=1 // pred_fallthru
      _
    // Predicated region
    $region30: #{tpu_custom_call.1} parent=1 // pred_check
      _
    $region31: #{tpu_custom_call.1} parent=1 // pred_check_branch
      %339 = sbr.rel (0) target = $region33
    $region32: #{tpu_custom_call.1} parent=1 // pred_region
      %s341 = ssub.s32 16, 16
      %342 = vsyncadd [#allocation8], %s341
      %s344 = sshll.u32 [#allocation11], 4
      %s345 = int_to_ptr.vmem [resolvable:$true] %s344
      %347 = dma.vmem_to_hbm [thread:$0]  %s345, 16, %s2, [#allocation8]
    $region33: #{tpu_custom_call.1} parent=1 // pred_fallthru
      _
    // Predicated region
    $region34: #{tpu_custom_call.1} parent=1 // pred_check
      _
    $region35: #{tpu_custom_call.1} parent=1 // pred_check_branch
      %349 = sbr.rel (0) target = $region37
    $region36: #{tpu_custom_call.1} parent=1 // pred_region
      %350 = dma.done [#allocation8], 16
    $region37: #{tpu_custom_call.1} parent=1 // pred_fallthru
      _
    %351 = vsyncpa [#allocation7], 1
    %352 = vsyncpa [#allocation10], 1
    %353 = vsyncpa [#allocation8], 1

</llo_original>
